<compile_context>
chip_gen: v6e
topology: v6e:2x2x1
jax: 0.10.0
libtpu: 0.0.40
codegen_flags: <defaults>
</compile_context>

<pallas_src>
import functools

import jax
import jax.numpy as jnp
from jax import lax
from jax.experimental import pallas as pl
from jax.experimental.pallas import tpu as pltpu


def _attention_loss_kernel(x_ref, idx_ref, out_ref, acc_ref, *, eps):
    """Blocks are transposed: (K, bn) with classes on sublanes, batch on lanes."""
    i = pl.program_id(1)

    @pl.when(i == 0)
    def _init():
        acc_ref[...] = jnp.zeros_like(acc_ref)

    xt = x_ref[...].astype(jnp.float32)                                  # (K, bn)
    K, bn = xt.shape

    # log-softmax pieces, reduced over the class (sublane) axis.
    m = jnp.max(xt, axis=0, keepdims=True)                               # (1, bn)
    lse = m + jnp.log(jnp.sum(jnp.exp(xt - m), axis=0, keepdims=True))   # (1, bn)
    sum_x = jnp.sum(xt, axis=0, keepdims=True)                           # (1, bn)

    # Streaming emulation of zeros.scatter_(1, idx, 1) (multi-hot with dedup):
    #   present_k[n] = any_j(idx[j, n] == k)
    #   mh_x[n] = sum_k present_k[n] * x[k, n] ;  cnt[n] = sum_k present_k[n]
    # The j-reduction is chunked over RC sublane rows so temporaries stay a few
    # vregs (no (bn, K, K) intermediate, no spills).
    RC = min(K, max(8, 8192 // max(bn, 128)))
    row_chunks = [(r0, min(RC, K - r0)) for r0 in range(0, K, RC)]       # static

    def class_body(k, carry):
        mh_x, cnt = carry
        present = jnp.zeros((1, bn), jnp.float32)
        for r0, rs in row_chunks:                                        # static loop
            hit = jnp.where(idx_ref[r0:r0 + rs, :] == k, 1.0, 0.0)       # (rs, bn)
            present = jnp.maximum(present, jnp.max(hit, axis=0, keepdims=True))
        xk = x_ref[pl.ds(k, 1), :].astype(jnp.float32)                   # (1, bn)
        return mh_x + present * xk, cnt + present

    zeros_row = jnp.zeros((1, bn), jnp.float32)
    mh_x, cnt = lax.fori_loop(0, K, class_body, (zeros_row, zeros_row))

    # loss_n = -sum_k ((1-eps)*multihot + eps/K) * logp
    #        = -(1-eps)*(mh_x - cnt*lse) - (eps/K)*(sum_x - K*lse)
    loss_b = -(1.0 - eps) * (mh_x - cnt * lse) - (eps / K) * (sum_x - K * lse)
    acc_ref[...] += loss_b                                               # (1, bn)

    @pl.when(i == pl.num_programs(1) - 1)
    def _finalize():
        out_ref[...] = jnp.reshape(
            jnp.sum(acc_ref[...], axis=1, keepdims=True), (1, 1, 1))


def _pick_block_n(n):
    for cand in (256, 128):
        if n % cand == 0:
            return cand
    return n  # whole batch in one block (lane dim == full array dim, always legal)


def attention_loss(attentions, masks, *, eps=0.1, block_n=None):
    """attentions: float [N, H, W]; masks: int [N, H, W] with values in [0, H*W)."""
    N, H, W = attentions.shape
    K = H * W
    assert masks.shape == (N, H, W)
    if block_n is None:
        block_n = _pick_block_n(N)
    assert N % block_n == 0, "batch must be divisible by block_n"
    assert block_n == N or block_n % 128 == 0, "batch tile must be lane-aligned or full"

    nb = N // block_n
    num_splits = 2 if (nb >= 2 and nb % 2 == 0) else 1   # both cores on megacore parts
    nb_inner = nb // num_splits

    # Transposed layout: classes on sublanes, batch on lanes.
    x_t = attentions.reshape(N, K).T                     # (K, N)
    idx_t = masks.reshape(N, K).T.astype(jnp.int32)      # (K, N)

    kernel = functools.partial(_attention_loss_kernel, eps=float(eps))
    in_map = lambda p, i: (0, p * nb_inner + i)

    partial_sums = pl.pallas_call(
        kernel,
        out_shape=jax.ShapeDtypeStruct((num_splits, 1, 1), jnp.float32),
        grid_spec=pltpu.PrefetchScalarGridSpec(
            num_scalar_prefetch=0,
            grid=(num_splits, nb_inner),
            in_specs=[
                pl.BlockSpec((K, block_n), in_map),      # logits block (transposed)
                pl.BlockSpec((K, block_n), in_map),      # index block (transposed)
            ],
            out_specs=pl.BlockSpec((1, 1, 1), lambda p, i: (p, 0, 0)),
            scratch_shapes=[pltpu.VMEM((1, block_n), jnp.float32)],
        ),
        compiler_params=pltpu.CompilerParams(
            dimension_semantics=("parallel", "arbitrary")),
    )(x_t, idx_t)
    return jnp.sum(partial_sums) / N


def attention_loss_ref(attentions, masks, eps=0.1):
    """Pure-JAX reference implementing the same semantics."""
    N, H, W = attentions.shape
    K = H * W
    x = attentions.reshape(N, K).astype(jnp.float32)
    idx = masks.reshape(N, K)
    logp = jax.nn.log_softmax(x, axis=1)
    multihot = jax.nn.one_hot(idx, K, dtype=jnp.float32).max(axis=1)  # (N, K)
    targets = (1.0 - eps) * multihot + eps / K
    return (-targets * logp).mean(0).sum()


if __name__ == "__main__":
    key = jax.random.PRNGKey(0)
    k1, k2, k3, k4 = jax.random.split(key, 4)

    # Small test: single batch block (block_n = N), K = 256 classes.
    N, H, W = 16, 16, 16
    attentions = jax.random.normal(k1, (N, H, W), dtype=jnp.float32)
    masks = jax.random.randint(k2, (N, H, W), 0, H * W, dtype=jnp.int32)
    loss = attention_loss(attentions, masks)
    jax.block_until_ready(loss)
    ref = attention_loss_ref(attentions, masks)
    # f32, different reduction order than the XLA reference -> modest tolerance.
    assert jnp.allclose(loss, ref, rtol=1e-4, atol=1e-4), (float(loss), float(ref))

    # Larger test: exercises multi-block accumulation + the 2-way parallel split.
    N2, H2, W2 = 512, 16, 16
    attentions2 = jax.random.normal(k3, (N2, H2, W2), dtype=jnp.float32)
    masks2 = jax.random.randint(k4, (N2, H2, W2), 0, H2 * W2, dtype=jnp.int32)
    loss2 = attention_loss(attentions2, masks2, block_n=128)
    jax.block_until_ready(loss2)
    ref2 = attention_loss_ref(attentions2, masks2)
    assert jnp.allclose(loss2, ref2, rtol=1e-4, atol=1e-4), (float(loss2), float(ref2))

    print("KERNEL_OK")
</pallas_src>

<mosaic_0001>
module attributes {stable_mosaic.version = 11 : i64} {
  func.func @_attention_loss_kernel(%arg0: i32, %arg1: i32, %arg2: memref<256x16xf32, #tpu.memory_space<vmem>>, %arg3: memref<256x16xi32, #tpu.memory_space<vmem>>, %arg4: memref<1x1x1xf32, #tpu.memory_space<vmem>>, %arg5: memref<1x16xf32, #tpu.memory_space<vmem>>) attributes {dimension_semantics = [#tpu.dimension_semantics<parallel>, #tpu.dimension_semantics<arbitrary>], iteration_bounds = array<i64: 1, 1>, scalar_prefetch = 0 : i64, scratch_operands = 1 : i64, tpu.core_type = #tpu.core_type<tc>, window_params = [{transform_indices = @transform_0, window_bounds = array<i64: 256, 16>}, {transform_indices = @transform_1, window_bounds = array<i64: 256, 16>}, {transform_indices = @transform_2, window_bounds = array<i64: 1, 1, 1>}]} {
    %c0_i32 = arith.constant 0 : i32
    %0 = arith.cmpi eq, %arg1, %c0_i32 : i32
    %1 = arith.extui %0 : i1 to i32
    %c0_i32_0 = arith.constant 0 : i32
    %2 = arith.cmpi ne, %1, %c0_i32_0 : i32
    scf.if %2 {
      %cst_16 = arith.constant 0.000000e+00 : f32
      %34 = vector.broadcast %cst_16 : f32 to vector<1x16xf32>
      %c0_17 = arith.constant 0 : index
      %c0_18 = arith.constant 0 : index
      %35 = vector.load %arg5[%c0_17, %c0_18] : memref<1x16xf32, #tpu.memory_space<vmem>>, vector<1x16xf32>
      tpu.vector_store %arg5[%c0_17, %c0_18], %34 {strides = array<i32>} : memref<1x16xf32, #tpu.memory_space<vmem>>, vector<1x16xf32>,
    } else {
    }
    %c0 = arith.constant 0 : index
    %c0_1 = arith.constant 0 : index
    %3 = vector.load %arg2[%c0, %c0_1] : memref<256x16xf32, #tpu.memory_space<vmem>>, vector<256x16xf32>
    %cst = arith.constant dense<0xFF800000> : vector<16xf32>
    %4 = vector.multi_reduction <maximumf>, %3, %cst [0] : vector<256x16xf32> to vector<16xf32>
    %5 = vector.shape_cast %4 : vector<16xf32> to vector<1x16xf32>
    %6 = vector.broadcast %5 : vector<1x16xf32> to vector<256x16xf32>
    %7 = arith.subf %3, %6 : vector<256x16xf32>
    %8 = math.exp %7 : vector<256x16xf32>
    %cst_2 = arith.constant dense<0.000000e+00> : vector<16xf32>
    %9 = vector.multi_reduction <add>, %8, %cst_2 [0] : vector<256x16xf32> to vector<16xf32>
    %10 = vector.shape_cast %9 : vector<16xf32> to vector<1x16xf32>
    %11 = math.log %10 : vector<1x16xf32>
    %12 = arith.addf %5, %11 : vector<1x16xf32>
    %cst_3 = arith.constant dense<0.000000e+00> : vector<16xf32>
    %13 = vector.multi_reduction <add>, %3, %cst_3 [0] : vector<256x16xf32> to vector<16xf32>
    %14 = vector.shape_cast %13 : vector<16xf32> to vector<1x16xf32>
    %cst_4 = arith.constant 0.000000e+00 : f32
    %15 = vector.broadcast %cst_4 : f32 to vector<1x16xf32>
    %c0_i32_5 = arith.constant 0 : i32
    %c256_i32 = arith.constant 256 : i32
    %16 = arith.addi %c0_i32_5, %c256_i32 : i32
    %c1_i32 = arith.constant 1 : i32
    %17:2 = scf.for %arg6 = %c0_i32_5 to %16 step %c1_i32 iter_args(%arg7 = %15, %arg8 = %15) -> (vector<1x16xf32>, vector<1x16xf32>)  : i32 {
      %cst_16 = arith.constant 0.000000e+00 : f32
      %34 = vector.broadcast %cst_16 : f32 to vector<1x16xf32>
      %c0_17 = arith.constant 0 : index
      %c0_18 = arith.constant 0 : index
      %35 = vector.load %arg3[%c0_17, %c0_18] : memref<256x16xi32, #tpu.memory_space<vmem>>, vector<64x16xi32>
      %36 = vector.broadcast %arg6 : i32 to vector<64x16xi32>
      %37 = arith.cmpi eq, %35, %36 : vector<64x16xi32>
      %cst_19 = arith.constant 1.000000e+00 : f32
      %cst_20 = arith.constant 0.000000e+00 : f32
      %38 = vector.broadcast %cst_19 : f32 to vector<64x16xf32>
      %39 = vector.broadcast %cst_20 : f32 to vector<64x16xf32>
      %40 = arith.select %37, %38, %39 : vector<64x16xi1>, vector<64x16xf32>
      %cst_21 = arith.constant dense<0xFF800000> : vector<16xf32>
      %41 = vector.multi_reduction <maximumf>, %40, %cst_21 [0] : vector<64x16xf32> to vector<16xf32>
      %42 = vector.shape_cast %41 : vector<16xf32> to vector<1x16xf32>
      %43 = arith.maximumf %34, %42 : vector<1x16xf32>
      %c64 = arith.constant 64 : index
      %c0_22 = arith.constant 0 : index
      %44 = vector.load %arg3[%c64, %c0_22] : memref<256x16xi32, #tpu.memory_space<vmem>>, vector<64x16xi32>
      %45 = vector.broadcast %arg6 : i32 to vector<64x16xi32>
      %46 = arith.cmpi eq, %44, %45 : vector<64x16xi32>
      %cst_23 = arith.constant 1.000000e+00 : f32
      %cst_24 = arith.constant 0.000000e+00 : f32
      %47 = vector.broadcast %cst_23 : f32 to vector<64x16xf32>
      %48 = vector.broadcast %cst_24 : f32 to vector<64x16xf32>
      %49 = arith.select %46, %47, %48 : vector<64x16xi1>, vector<64x16xf32>
      %cst_25 = arith.constant dense<0xFF800000> : vector<16xf32>
      %50 = vector.multi_reduction <maximumf>, %49, %cst_25 [0] : vector<64x16xf32> to vector<16xf32>
      %51 = vector.shape_cast %50 : vector<16xf32> to vector<1x16xf32>
      %52 = arith.maximumf %43, %51 : vector<1x16xf32>
      %c128 = arith.constant 128 : index
      %c0_26 = arith.constant 0 : index
      %53 = vector.load %arg3[%c128, %c0_26] : memref<256x16xi32, #tpu.memory_space<vmem>>, vector<64x16xi32>
      %54 = vector.broadcast %arg6 : i32 to vector<64x16xi32>
      %55 = arith.cmpi eq, %53, %54 : vector<64x16xi32>
      %cst_27 = arith.constant 1.000000e+00 : f32
      %cst_28 = arith.constant 0.000000e+00 : f32
      %56 = vector.broadcast %cst_27 : f32 to vector<64x16xf32>
      %57 = vector.broadcast %cst_28 : f32 to vector<64x16xf32>
      %58 = arith.select %55, %56, %57 : vector<64x16xi1>, vector<64x16xf32>
      %cst_29 = arith.constant dense<0xFF800000> : vector<16xf32>
      %59 = vector.multi_reduction <maximumf>, %58, %cst_29 [0] : vector<64x16xf32> to vector<16xf32>
      %60 = vector.shape_cast %59 : vector<16xf32> to vector<1x16xf32>
      %61 = arith.maximumf %52, %60 : vector<1x16xf32>
      %c192 = arith.constant 192 : index
      %c0_30 = arith.constant 0 : index
      %62 = vector.load %arg3[%c192, %c0_30] : memref<256x16xi32, #tpu.memory_space<vmem>>, vector<64x16xi32>
      %63 = vector.broadcast %arg6 : i32 to vector<64x16xi32>
      %64 = arith.cmpi eq, %62, %63 : vector<64x16xi32>
      %cst_31 = arith.constant 1.000000e+00 : f32
      %cst_32 = arith.constant 0.000000e+00 : f32
      %65 = vector.broadcast %cst_31 : f32 to vector<64x16xf32>
      %66 = vector.broadcast %cst_32 : f32 to vector<64x16xf32>
      %67 = arith.select %64, %65, %66 : vector<64x16xi1>, vector<64x16xf32>
      %cst_33 = arith.constant dense<0xFF800000> : vector<16xf32>
      %68 = vector.multi_reduction <maximumf>, %67, %cst_33 [0] : vector<64x16xf32> to vector<16xf32>
      %69 = vector.shape_cast %68 : vector<16xf32> to vector<1x16xf32>
      %70 = arith.maximumf %61, %69 : vector<1x16xf32>
      %71 = arith.index_cast %arg6 : i32 to index
      %c0_34 = arith.constant 0 : index
      %72 = vector.load %arg2[%71, %c0_34] : memref<256x16xf32, #tpu.memory_space<vmem>>, vector<1x16xf32>
      %73 = arith.mulf %70, %72 : vector<1x16xf32>
      %74 = arith.addf %arg7, %73 : vector<1x16xf32>
      %75 = arith.addf %arg8, %70 : vector<1x16xf32>
      scf.yield %74, %75 : vector<1x16xf32>, vector<1x16xf32>
    }
    %c256_i32_6 = arith.constant 256 : i32
    %18 = arith.mulf %17#1, %12 : vector<1x16xf32>
    %19 = arith.subf %17#0, %18 : vector<1x16xf32>
    %cst_7 = arith.constant -0.899999976 : f32
    %20 = vector.broadcast %cst_7 : f32 to vector<1x16xf32>
    %21 = arith.mulf %20, %19 : vector<1x16xf32>
    %cst_8 = arith.constant 2.560000e+02 : f32
    %22 = vector.broadcast %cst_8 : f32 to vector<1x16xf32>
    %23 = arith.mulf %22, %12 : vector<1x16xf32>
    %24 = arith.subf %14, %23 : vector<1x16xf32>
    %cst_9 = arith.constant 3.906250e-04 : f32
    %25 = vector.broadcast %cst_9 : f32 to vector<1x16xf32>
    %26 = arith.mulf %25, %24 : vector<1x16xf32>
    %27 = arith.subf %21, %26 : vector<1x16xf32>
    %c0_10 = arith.constant 0 : index
    %c0_11 = arith.constant 0 : index
    %28 = vector.load %arg5[%c0_10, %c0_11] : memref<1x16xf32, #tpu.memory_space<vmem>>, vector<1x16xf32>
    %29 = arith.addf %28, %27 : vector<1x16xf32>
    %c0_12 = arith.constant 0 : index
    %c0_13 = arith.constant 0 : index
    %30 = vector.load %arg5[%c0_12, %c0_13] : memref<1x16xf32, #tpu.memory_space<vmem>>, vector<1x16xf32>
    tpu.vector_store %arg5[%c0_12, %c0_13], %29 {strides = array<i32>} : memref<1x16xf32, #tpu.memory_space<vmem>>, vector<1x16xf32>,
    %c0_i32_14 = arith.constant 0 : i32
    %31 = arith.cmpi eq, %arg1, %c0_i32_14 : i32
    %32 = arith.extui %31 : i1 to i32
    %c0_i32_15 = arith.constant 0 : i32
    %33 = arith.cmpi ne, %32, %c0_i32_15 : i32
    scf.if %33 {
      %c0_16 = arith.constant 0 : index
      %c0_17 = arith.constant 0 : index
      %34 = vector.load %arg5[%c0_16, %c0_17] : memref<1x16xf32, #tpu.memory_space<vmem>>, vector<1x16xf32>
      %cst_18 = arith.constant dense<0.000000e+00> : vector<1xf32>
      %35 = vector.multi_reduction <add>, %34, %cst_18 [1] : vector<1x16xf32> to vector<1xf32>
      %36 = vector.shape_cast %35 : vector<1xf32> to vector<1x1xf32>
      %37 = vector.shape_cast %36 : vector<1x1xf32> to vector<1x1x1xf32>
      %c0_19 = arith.constant 0 : index
      %c0_20 = arith.constant 0 : index
      %c0_21 = arith.constant 0 : index
      %38 = vector.load %arg4[%c0_19, %c0_20, %c0_21] : memref<1x1x1xf32, #tpu.memory_space<vmem>>, vector<1x1x1xf32>
      tpu.vector_store %arg4[%c0_19, %c0_20, %c0_21], %37 {strides = array<i32>} : memref<1x1x1xf32, #tpu.memory_space<vmem>>, vector<1x1x1xf32>,
    } else {
    }
    return
  }
  func.func @transform_0(%arg0: i32, %arg1: i32) -> (i32, i32) {
    %c1_i32 = arith.constant 1 : i32
    %0 = arith.muli %arg0, %c1_i32 : i32
    %1 = arith.addi %0, %arg1 : i32
    %c0_i32 = arith.constant 0 : i32
    %c0_i32_0 = arith.constant 0 : i32
    return %c0_i32, %1 : i32, i32
  }
  func.func @transform_1(%arg0: i32, %arg1: i32) -> (i32, i32) {
    %c1_i32 = arith.constant 1 : i32
    %0 = arith.muli %arg0, %c1_i32 : i32
    %1 = arith.addi %0, %arg1 : i32
    %c0_i32 = arith.constant 0 : i32
    %c0_i32_0 = arith.constant 0 : i32
    return %c0_i32, %1 : i32, i32
  }
  func.func @transform_2(%arg0: i32, %arg1: i32) -> (i32, i32, i32) {
    %c0_i32 = arith.constant 0 : i32
    %c0_i32_0 = arith.constant 0 : i32
    %c0_i32_1 = arith.constant 0 : i32
    return %arg0, %c0_i32, %c0_i32_0 : i32, i32, i32
  }
}

</mosaic_0001>

<llo_original>
// kernel: tpu_custom_call.1
$region0: #{tpu_custom_call.1}
  #allocation0 [shape = 'u32[]', space=smem, size = 0x4, offset = 0x4, fixed_abs, tag = 'smem constant byte address 0x4 - core index']
  #allocation1 [shape = 'u32[144,128]{1,0:T(1,128)}', space=vmem, size = 0x12000, scoped, tag = 'internal scratch']
  #allocation2 [shape = 'f32[1,16]{1,0:T(1,128)}', space=vmem, size = 0x200, scoped, tag = 'scratch operand']
  %s0 = inlined_call_operand.vmem [shape: f32[256,16], index: 0, kind: input, shape index: {}]
  %s1 = inlined_call_operand.vmem [shape: s32[256,16], index: 1, kind: input, shape index: {}]
  %s2 = inlined_call_operand.hbm [shape: f32[1,1,1], index: 2, kind: output, shape index: {}]
  %s3 = sld [smem:[#allocation0]]
  $region33: #{tpu_custom_call.1} parent=0
    _
  %s5 = ssub.s32 1, %s3
  %s6 = scalar_select 0, %s5, %s3
  $region1: #{tpu_custom_call.1} parent=0
    #allocation3 [shape = 'u8[512]{0}', space=vmem, size = 0x400, scoped, tag = 'output window, operand 0, single buffered']
    #allocation4 [shape = 's32[1]{0}', space=sflag, size = 0x4, scoped, tag = 'scoped memory for tpu_custom_call.1']
    %7 = vsyncpa [#allocation4], 0
    // Predicated region
    $region2: #{tpu_custom_call.1} parent=1 // pred_check
      _
    $region3: #{tpu_custom_call.1} parent=1 // pred_check_branch
      %9 = sbr.rel (0) target = $region5
    $region4: #{tpu_custom_call.1} parent=1 // pred_region
      %s10 = sadd.s32 0, 0
      %p11 = scmp.lt.s32.totalorder %s10, 0
      %s12 = scalar_select %p11, %s10, 0
      %s13 = smul.addr %s12, 8
      %s14 = scalar_lea.vmem %s0, %s13
      %s15 = sadd.s32 0, 0
    $region5: #{tpu_custom_call.1} parent=1 // pred_fallthru
      _
    // Predicated region
    $region6: #{tpu_custom_call.1} parent=1 // pred_check
      _
    $region7: #{tpu_custom_call.1} parent=1 // pred_check_branch
      %17 = sbr.rel (0) target = $region9
    $region8: #{tpu_custom_call.1} parent=1 // pred_region
      %s18 = sadd.s32 0, 0
      %p19 = scmp.lt.s32.totalorder %s18, 0
      %s20 = scalar_select %p19, %s18, 0
      %s21 = smul.addr %s20, 8
      %s22 = scalar_lea.vmem %s1, %s21
      %s23 = sadd.s32 0, 0
    $region9: #{tpu_custom_call.1} parent=1 // pred_fallthru
      _
    %s24 = sadd.s32 0, 0
    %p25 = scmp.lt.s32.totalorder %s24, 0
    %s26 = scalar_select %p25, %s24, 0
    %s27 = smul.addr %s26, 8
    %s28 = scalar_lea.vmem %s0, %s27
    %s29 = sadd.s32 0, 0
    %p30 = scmp.lt.s32.totalorder %s29, 0
    %s31 = scalar_select %p30, %s29, 0
    %s32 = smul.addr %s31, 8
    %s33 = scalar_lea.vmem %s1, %s32
    %s34 = sadd.s32 0, 0
    %p35 = scmp.lt.s32.totalorder %s34, 0
    %s36 = scalar_select %p35, %s34, 0
    %s37 = smul.addr %s36, 8
    %s38 = scalar_lea.vmem %s0, %s37
    %s39 = sadd.s32 0, 0
    %s40 = sadd.s32 0, 0
    %p41 = scmp.lt.s32.totalorder %s40, 0
    %s42 = scalar_select %p41, %s40, 0
    %s43 = smul.addr %s42, 8
    %s44 = scalar_lea.vmem %s1, %s43
    %s45 = sadd.s32 0, 0
    %p46 = scmp.eq.s32.totalorder 0, 0
    // Predicated region
    $region10: #{tpu_custom_call.1} parent=1 // pred_check
      %p47 = pneg %p46
    $region11: #{tpu_custom_call.1} parent=1 // pred_check_branch
      %49 = sbr.rel (%p47) target = $region13
    $region12: #{tpu_custom_call.1} parent=1 // pred_region
      %vm50 = vcmask 122880
      %51 = vst.msk [vmem:[#allocation2] sm:$0x1] %vm50, 0.0
    $region13: #{tpu_custom_call.1} parent=1 // pred_fallthru
      _
    %v52 = vld [vmem:[%s38] sm:$0xff]
    %v53 = vld [vmem:[%s38 + $0x8] sm:$0xff]
    %v54 = vld [vmem:[%s38 + $0x10] sm:$0xff]
    %v55 = vld [vmem:[%s38 + $0x18] sm:$0xff]
    %v56 = vld [vmem:[%s38 + $0x20] sm:$0xff]
    %v57 = vld [vmem:[%s38 + $0x28] sm:$0xff]
    %v58 = vld [vmem:[%s38 + $0x30] sm:$0xff]
    %v59 = vld [vmem:[%s38 + $0x38] sm:$0xff]
    %v60 = vld [vmem:[%s38 + $0x40] sm:$0xff]
    %v61 = vld [vmem:[%s38 + $0x48] sm:$0xff]
    %v62 = vld [vmem:[%s38 + $0x50] sm:$0xff]
    %v63 = vld [vmem:[%s38 + $0x58] sm:$0xff]
    %v64 = vld [vmem:[%s38 + $0x60] sm:$0xff]
    %v65 = vld [vmem:[%s38 + $0x68] sm:$0xff]
    %v66 = vld [vmem:[%s38 + $0x70] sm:$0xff]
    %v67 = vld [vmem:[%s38 + $0x78] sm:$0xff]
    %v68 = vld [vmem:[%s38 + $0x80] sm:$0xff]
    %v69 = vld [vmem:[%s38 + $0x88] sm:$0xff]
    %v70 = vld [vmem:[%s38 + $0x90] sm:$0xff]
    %v71 = vld [vmem:[%s38 + $0x98] sm:$0xff]
    %v72 = vld [vmem:[%s38 + $0xa0] sm:$0xff]
    %v73 = vld [vmem:[%s38 + $0xa8] sm:$0xff]
    %v74 = vld [vmem:[%s38 + $0xb0] sm:$0xff]
    %v75 = vld [vmem:[%s38 + $0xb8] sm:$0xff]
    %v76 = vld [vmem:[%s38 + $0xc0] sm:$0xff]
    %v77 = vld [vmem:[%s38 + $0xc8] sm:$0xff]
    %v78 = vld [vmem:[%s38 + $0xd0] sm:$0xff]
    %v79 = vld [vmem:[%s38 + $0xd8] sm:$0xff]
    %v80 = vld [vmem:[%s38 + $0xe0] sm:$0xff]
    %v81 = vld [vmem:[%s38 + $0xe8] sm:$0xff]
    %v82 = vld [vmem:[%s38 + $0xf0] sm:$0xff]
    %v83 = vld [vmem:[%s38 + $0xf8] sm:$0xff]
    %vm84 = vcmask 130048
    %v85 = vsel %vm84, %v52, -inf
    %v86 = vsel %vm84, %v53, -inf
    %v87 = vsel %vm84, %v54, -inf
    %v88 = vsel %vm84, %v55, -inf
    %v89 = vsel %vm84, %v56, -inf
    %v90 = vmax.f32 %v85, %v89
    %v91 = vsel %vm84, %v57, -inf
    %v92 = vmax.f32 %v86, %v91
    %v93 = vsel %vm84, %v58, -inf
    %v94 = vmax.f32 %v87, %v93
    %v95 = vsel %vm84, %v59, -inf
    %v96 = vmax.f32 %v88, %v95
    %v97 = vsel %vm84, %v60, -inf
    %v98 = vmax.f32 %v90, %v97
    %v99 = vsel %vm84, %v61, -inf
    %v100 = vmax.f32 %v92, %v99
    %v101 = vsel %vm84, %v62, -inf
    %v102 = vmax.f32 %v94, %v101
    %v103 = vsel %vm84, %v63, -inf
    %v104 = vmax.f32 %v96, %v103
    %v105 = vsel %vm84, %v64, -inf
    %v106 = vmax.f32 %v98, %v105
    %v107 = vsel %vm84, %v65, -inf
    %v108 = vmax.f32 %v100, %v107
    %v109 = vsel %vm84, %v66, -inf
    %v110 = vmax.f32 %v102, %v109
    %v111 = vsel %vm84, %v67, -inf
    %v112 = vmax.f32 %v104, %v111
    %v113 = vsel %vm84, %v68, -inf
    %v114 = vmax.f32 %v106, %v113
    %v115 = vsel %vm84, %v69, -inf
    %v116 = vmax.f32 %v108, %v115
    %v117 = vsel %vm84, %v70, -inf
    %v118 = vmax.f32 %v110, %v117
    %v119 = vsel %vm84, %v71, -inf
    %v120 = vmax.f32 %v112, %v119
    %v121 = vsel %vm84, %v72, -inf
    %v122 = vmax.f32 %v114, %v121
    %v123 = vsel %vm84, %v73, -inf
    %v124 = vmax.f32 %v116, %v123
    %v125 = vsel %vm84, %v74, -inf
    %v126 = vmax.f32 %v118, %v125
    %v127 = vsel %vm84, %v75, -inf
    %v128 = vmax.f32 %v120, %v127
    %v129 = vsel %vm84, %v76, -inf
    %v130 = vmax.f32 %v122, %v129
    %v131 = vsel %vm84, %v77, -inf
    %v132 = vmax.f32 %v124, %v131
    %v133 = vsel %vm84, %v78, -inf
    %v134 = vmax.f32 %v126, %v133
    %v135 = vsel %vm84, %v79, -inf
    %v136 = vmax.f32 %v128, %v135
    %v137 = vsel %vm84, %v80, -inf
    %v138 = vmax.f32 %v130, %v137
    %v139 = vsel %vm84, %v81, -inf
    %v140 = vmax.f32 %v132, %v139
    %v141 = vsel %vm84, %v82, -inf
    %v142 = vmax.f32 %v134, %v141
    %v143 = vsel %vm84, %v83, -inf
    %v144 = vmax.f32 %v136, %v143
    %v145 = vmax.f32 %v138, %v140
    %v146 = vmax.f32 %v142, %v144
    %v147 = vmax.f32 %v145, %v146
    %v148 = vrot.slane %v147, 4
    %v149 = vmax.f32 %v147, %v148
    %v150 = vrot.slane %v149, 2
    %v151 = vmax.f32 %v149, %v150
    %v152 = vrot.slane %v151, 1
    %v153 = vmax.f32 %v151, %v152
    %v154 = vsub.f32 %v52, %v153
    %v155 = vsub.f32 %v53, %v153
    %v156 = vsub.f32 %v54, %v153
    %v157 = vsub.f32 %v55, %v153
    %v158 = vsub.f32 %v56, %v153
    %v159 = vsub.f32 %v57, %v153
    %v160 = vsub.f32 %v58, %v153
    %v161 = vsub.f32 %v59, %v153
    %v162 = vsub.f32 %v60, %v153
    %v163 = vsub.f32 %v61, %v153
    %v164 = vsub.f32 %v62, %v153
    %v165 = vsub.f32 %v63, %v153
    %v166 = vsub.f32 %v64, %v153
    %v167 = vsub.f32 %v65, %v153
    %v168 = vsub.f32 %v66, %v153
    %v169 = vsub.f32 %v67, %v153
    %v170 = vsub.f32 %v68, %v153
    %v171 = vsub.f32 %v69, %v153
    %v172 = vsub.f32 %v70, %v153
    %v173 = vsub.f32 %v71, %v153
    %v174 = vsub.f32 %v72, %v153
    %v175 = vsub.f32 %v73, %v153
    %v176 = vsub.f32 %v74, %v153
    %v177 = vsub.f32 %v75, %v153
    %v178 = vsub.f32 %v76, %v153
    %v179 = vsub.f32 %v77, %v153
    %v180 = vsub.f32 %v78, %v153
    %v181 = vsub.f32 %v79, %v153
    %v182 = vsub.f32 %v80, %v153
    %v183 = vsub.f32 %v81, %v153
    %v184 = vsub.f32 %v82, %v153
    %v185 = vsub.f32 %v83, %v153
    %v186 = vmul.f32 %v154, 1.442695
    %v187 = vpow.pop %v186
    %v188 = vmul.f32 %v155, 1.442695
    %v189 = vpow.pop %v188
    %v190 = vmul.f32 %v156, 1.442695
    %v191 = vpow.pop %v190
    %v192 = vmul.f32 %v157, 1.442695
    %v193 = vpow.pop %v192
    %v194 = vmul.f32 %v158, 1.442695
    %v195 = vpow.pop %v194
    %v196 = vmul.f32 %v159, 1.442695
    %v197 = vpow.pop %v196
    %v198 = vmul.f32 %v160, 1.442695
    %v199 = vpow.pop %v198
    %v200 = vmul.f32 %v161, 1.442695
    %v201 = vpow.pop %v200
    %v202 = vmul.f32 %v162, 1.442695
    %v203 = vpow.pop %v202
    %v204 = vmul.f32 %v163, 1.442695
    %v205 = vpow.pop %v204
    %v206 = vmul.f32 %v164, 1.442695
    %v207 = vpow.pop %v206
    %v208 = vmul.f32 %v165, 1.442695
    %v209 = vpow.pop %v208
    %v210 = vmul.f32 %v166, 1.442695
    %v211 = vpow.pop %v210
    %v212 = vmul.f32 %v167, 1.442695
    %v213 = vpow.pop %v212
    %v214 = vmul.f32 %v168, 1.442695
    %v215 = vpow.pop %v214
    %v216 = vmul.f32 %v169, 1.442695
    %v217 = vpow.pop %v216
    %v218 = vmul.f32 %v170, 1.442695
    %v219 = vpow.pop %v218
    %v220 = vmul.f32 %v171, 1.442695
    %v221 = vpow.pop %v220
    %v222 = vmul.f32 %v172, 1.442695
    %v223 = vpow.pop %v222
    %v224 = vmul.f32 %v173, 1.442695
    %v225 = vpow.pop %v224
    %v226 = vmul.f32 %v174, 1.442695
    %v227 = vpow.pop %v226
    %v228 = vmul.f32 %v175, 1.442695
    %v229 = vpow.pop %v228
    %v230 = vmul.f32 %v176, 1.442695
    %v231 = vpow.pop %v230
    %v232 = vmul.f32 %v177, 1.442695
    %v233 = vpow.pop %v232
    %v234 = vmul.f32 %v178, 1.442695
    %v235 = vpow.pop %v234
    %v236 = vmul.f32 %v179, 1.442695
    %v237 = vpow.pop %v236
    %v238 = vmul.f32 %v180, 1.442695
    %v239 = vpow.pop %v238
    %v240 = vmul.f32 %v181, 1.442695
    %v241 = vpow.pop %v240
    %v242 = vmul.f32 %v182, 1.442695
    %v243 = vpow.pop %v242
    %v244 = vmul.f32 %v183, 1.442695
    %v245 = vpow.pop %v244
    %v246 = vmul.f32 %v184, 1.442695
    %v247 = vpow.pop %v246
    %v248 = vmul.f32 %v185, 1.442695
    %v249 = vpow.pop %v248
    %v250 = vsel %vm84, %v187, 0.0
    %v251 = vsel %vm84, %v189, 0.0
    %v252 = vadd.f32 %v250, %v251
    %v253 = vsel %vm84, %v191, 0.0
    %v254 = vadd.f32 %v252, %v253
    %v255 = vsel %vm84, %v193, 0.0
    %v256 = vadd.f32 %v254, %v255
    %v257 = vsel %vm84, %v195, 0.0
    %v258 = vadd.f32 %v256, %v257
    %v259 = vsel %vm84, %v197, 0.0
    %v260 = vadd.f32 %v258, %v259
    %v261 = vsel %vm84, %v199, 0.0
    %v262 = vadd.f32 %v260, %v261
    %v263 = vsel %vm84, %v201, 0.0
    %v264 = vadd.f32 %v262, %v263
    %v265 = vsel %vm84, %v203, 0.0
    %v266 = vadd.f32 %v264, %v265
    %v267 = vsel %vm84, %v205, 0.0
    %v268 = vadd.f32 %v266, %v267
    %v269 = vsel %vm84, %v207, 0.0
    %v270 = vadd.f32 %v268, %v269
    %v271 = vsel %vm84, %v209, 0.0
    %v272 = vadd.f32 %v270, %v271
    %v273 = vsel %vm84, %v211, 0.0
    %v274 = vadd.f32 %v272, %v273
    %v275 = vsel %vm84, %v213, 0.0
    %v276 = vadd.f32 %v274, %v275
    %v277 = vsel %vm84, %v215, 0.0
    %v278 = vadd.f32 %v276, %v277
    %v279 = vsel %vm84, %v217, 0.0
    %v280 = vadd.f32 %v278, %v279
    %v281 = vsel %vm84, %v219, 0.0
    %v282 = vadd.f32 %v280, %v281
    %v283 = vsel %vm84, %v221, 0.0
    %v284 = vadd.f32 %v282, %v283
    %v285 = vsel %vm84, %v223, 0.0
    %v286 = vadd.f32 %v284, %v285
    %v287 = vsel %vm84, %v225, 0.0
    %v288 = vadd.f32 %v286, %v287
    %v289 = vsel %vm84, %v227, 0.0
    %v290 = vadd.f32 %v288, %v289
    %v291 = vsel %vm84, %v229, 0.0
    %v292 = vadd.f32 %v290, %v291
    %v293 = vsel %vm84, %v231, 0.0
    %v294 = vadd.f32 %v292, %v293
    %v295 = vsel %vm84, %v233, 0.0
    %v296 = vadd.f32 %v294, %v295
    %v297 = vsel %vm84, %v235, 0.0
    %v298 = vadd.f32 %v296, %v297
    %v299 = vsel %vm84, %v237, 0.0
    %v300 = vadd.f32 %v298, %v299
    %v301 = vsel %vm84, %v239, 0.0
    %v302 = vadd.f32 %v300, %v301
    %v303 = vsel %vm84, %v241, 0.0
    %v304 = vadd.f32 %v302, %v303
    %v305 = vsel %vm84, %v243, 0.0
    %v306 = vadd.f32 %v304, %v305
    %v307 = vsel %vm84, %v245, 0.0
    %v308 = vadd.f32 %v306, %v307
    %v309 = vsel %vm84, %v247, 0.0
    %v310 = vadd.f32 %v308, %v309
    %v311 = vsel %vm84, %v249, 0.0
    %v312 = vadd.f32 %v310, %v311
    %v313 = vrot.slane %v312, 4
    %v314 = vadd.f32 %v312, %v313
    %v315 = vrot.slane %v314, 2
    %v316 = vadd.f32 %v314, %v315
    %v317 = vrot.slane %v316, 1
    %v318 = vadd.f32 %v316, %v317
    %v319 = vlog2.pop %v318
    %v320 = vmul.f32 %v319, 0.6931472
    %v321 = vadd.f32 %v153, %v320
    %v322 = vsel %vm84, %v52, 0.0
    %v323 = vsel %vm84, %v53, 0.0
    %v324 = vadd.f32 %v322, %v323
    %v325 = vsel %vm84, %v54, 0.0
    %v326 = vadd.f32 %v324, %v325
    %v327 = vsel %vm84, %v55, 0.0
    %v328 = vadd.f32 %v326, %v327
    %v329 = vsel %vm84, %v56, 0.0
    %v330 = vadd.f32 %v328, %v329
    %v331 = vsel %vm84, %v57, 0.0
    %v332 = vadd.f32 %v330, %v331
    %v333 = vsel %vm84, %v58, 0.0
    %v334 = vadd.f32 %v332, %v333
    %v335 = vsel %vm84, %v59, 0.0
    %v336 = vadd.f32 %v334, %v335
    %v337 = vsel %vm84, %v60, 0.0
    %v338 = vadd.f32 %v336, %v337
    %v339 = vsel %vm84, %v61, 0.0
    %v340 = vadd.f32 %v338, %v339
    %v341 = vsel %vm84, %v62, 0.0
    %v342 = vadd.f32 %v340, %v341
    %v343 = vsel %vm84, %v63, 0.0
    %v344 = vadd.f32 %v342, %v343
    %v345 = vsel %vm84, %v64, 0.0
    %v346 = vadd.f32 %v344, %v345
    %v347 = vsel %vm84, %v65, 0.0
    %v348 = vadd.f32 %v346, %v347
    %v349 = vsel %vm84, %v66, 0.0
    %v350 = vadd.f32 %v348, %v349
    %v351 = vsel %vm84, %v67, 0.0
    %v352 = vadd.f32 %v350, %v351
    %v353 = vsel %vm84, %v68, 0.0
    %v354 = vadd.f32 %v352, %v353
    %v355 = vsel %vm84, %v69, 0.0
    %v356 = vadd.f32 %v354, %v355
    %v357 = vsel %vm84, %v70, 0.0
    %v358 = vadd.f32 %v356, %v357
    %v359 = vsel %vm84, %v71, 0.0
    %v360 = vadd.f32 %v358, %v359
    %v361 = vsel %vm84, %v72, 0.0
    %v362 = vadd.f32 %v360, %v361
    %v363 = vsel %vm84, %v73, 0.0
    %v364 = vadd.f32 %v362, %v363
    %v365 = vsel %vm84, %v74, 0.0
    %v366 = vadd.f32 %v364, %v365
    %v367 = vsel %vm84, %v75, 0.0
    %v368 = vadd.f32 %v366, %v367
    %v369 = vsel %vm84, %v76, 0.0
    %v370 = vadd.f32 %v368, %v369
    %v371 = vsel %vm84, %v77, 0.0
    %v372 = vadd.f32 %v370, %v371
    %v373 = vsel %vm84, %v78, 0.0
    %v374 = vadd.f32 %v372, %v373
    %v375 = vsel %vm84, %v79, 0.0
    %v376 = vadd.f32 %v374, %v375
    %v377 = vsel %vm84, %v80, 0.0
    %v378 = vadd.f32 %v376, %v377
    %v379 = vsel %vm84, %v81, 0.0
    %v380 = vadd.f32 %v378, %v379
    %v381 = vsel %vm84, %v82, 0.0
    %v382 = vadd.f32 %v380, %v381
    %v383 = vsel %vm84, %v83, 0.0
    %v384 = vadd.f32 %v382, %v383
    %v385 = vrot.slane %v384, 4
    %v386 = vadd.f32 %v384, %v385
    %v387 = vrot.slane %v386, 2
    %v388 = vadd.f32 %v386, %v387
    %v389 = vrot.slane %v388, 1
    %v390 = vadd.f32 %v388, %v389
    loop: start=0, step=1, limit=256
    $region14: #{tpu_custom_call.1} parent=1 // loop_pre_header
      _
    $region15: #{tpu_custom_call.1} parent=1 // loop_header
      %s392 = sphi 0, %s396
      %p393 = scmp.ge.s32.totalorder %s392, 256
      %v397 = vphi 0.0, %v587
      %v398 = vphi 0.0, %v588
    $region16: #{tpu_custom_call.1} parent=1 // loop_header_branch
      %395 = sbr.rel (%p393) target = $region20
    $region17: #{tpu_custom_call.1} parent=1 // loop_body
      %v399 = vld [vmem:[%s44] sm:$0xff]
      %v400 = vld [vmem:[%s44 + $0x8] sm:$0xff]
      %v401 = vld [vmem:[%s44 + $0x10] sm:$0xff]
      %v402 = vld [vmem:[%s44 + $0x18] sm:$0xff]
      %v403 = vld [vmem:[%s44 + $0x20] sm:$0xff]
      %v404 = vld [vmem:[%s44 + $0x28] sm:$0xff]
      %v405 = vld [vmem:[%s44 + $0x30] sm:$0xff]
      %v406 = vld [vmem:[%s44 + $0x38] sm:$0xff]
      %v407 = vstv %s392
      %vm408 = vcmp.eq.s32.totalorder %v399, %v407
      %vm409 = vcmp.eq.s32.totalorder %v400, %v407
      %vm410 = vcmp.eq.s32.totalorder %v401, %v407
      %vm411 = vcmp.eq.s32.totalorder %v402, %v407
      %vm412 = vcmp.eq.s32.totalorder %v403, %v407
      %vm413 = vcmp.eq.s32.totalorder %v404, %v407
      %vm414 = vcmp.eq.s32.totalorder %v405, %v407
      %vm415 = vcmp.eq.s32.totalorder %v406, %v407
      %v416 = vsel %vm408, 1.0, 0.0
      %v417 = vsel %vm409, 1.0, 0.0
      %v418 = vsel %vm410, 1.0, 0.0
      %v419 = vsel %vm411, 1.0, 0.0
      %v420 = vsel %vm412, 1.0, 0.0
      %v421 = vsel %vm413, 1.0, 0.0
      %v422 = vsel %vm414, 1.0, 0.0
      %v423 = vsel %vm415, 1.0, 0.0
      %v424 = vsel %vm84, %v416, -inf
      %v425 = vsel %vm84, %v417, -inf
      %v426 = vsel %vm84, %v418, -inf
      %v427 = vsel %vm84, %v419, -inf
      %v428 = vsel %vm84, %v420, -inf
      %v429 = vmax.f32 %v424, %v428
      %v430 = vsel %vm84, %v421, -inf
      %v431 = vmax.f32 %v425, %v430
      %v432 = vsel %vm84, %v422, -inf
      %v433 = vmax.f32 %v426, %v432
      %v434 = vsel %vm84, %v423, -inf
      %v435 = vmax.f32 %v427, %v434
      %v436 = vmax.f32 %v429, %v431
      %v437 = vmax.f32 %v433, %v435
      %v438 = vmax.f32 %v436, %v437
      %v439 = vrot.slane %v438, 4
      %v440 = vmax.f32 %v438, %v439
      %v441 = vrot.slane %v440, 2
      %v442 = vmax.f32 %v440, %v441
      %v443 = vrot.slane %v442, 1
      %v444 = vmax.f32 %v442, %v443
      %v445 = vmax.f32 %v444, 0.0
      %v446 = vld [vmem:[%s44 + $0x40] sm:$0xff]
      %v447 = vld [vmem:[%s44 + $0x48] sm:$0xff]
      %v448 = vld [vmem:[%s44 + $0x50] sm:$0xff]
      %v449 = vld [vmem:[%s44 + $0x58] sm:$0xff]
      %v450 = vld [vmem:[%s44 + $0x60] sm:$0xff]
      %v451 = vld [vmem:[%s44 + $0x68] sm:$0xff]
      %v452 = vld [vmem:[%s44 + $0x70] sm:$0xff]
      %v453 = vld [vmem:[%s44 + $0x78] sm:$0xff]
      %vm454 = vcmp.eq.s32.totalorder %v446, %v407
      %vm455 = vcmp.eq.s32.totalorder %v447, %v407
      %vm456 = vcmp.eq.s32.totalorder %v448, %v407
      %vm457 = vcmp.eq.s32.totalorder %v449, %v407
      %vm458 = vcmp.eq.s32.totalorder %v450, %v407
      %vm459 = vcmp.eq.s32.totalorder %v451, %v407
      %vm460 = vcmp.eq.s32.totalorder %v452, %v407
      %vm461 = vcmp.eq.s32.totalorder %v453, %v407
      %v462 = vsel %vm454, 1.0, 0.0
      %v463 = vsel %vm455, 1.0, 0.0
      %v464 = vsel %vm456, 1.0, 0.0
      %v465 = vsel %vm457, 1.0, 0.0
      %v466 = vsel %vm458, 1.0, 0.0
      %v467 = vsel %vm459, 1.0, 0.0
      %v468 = vsel %vm460, 1.0, 0.0
      %v469 = vsel %vm461, 1.0, 0.0
      %v470 = vsel %vm84, %v462, -inf
      %v471 = vsel %vm84, %v463, -inf
      %v472 = vsel %vm84, %v464, -inf
      %v473 = vsel %vm84, %v465, -inf
      %v474 = vsel %vm84, %v466, -inf
      %v475 = vmax.f32 %v470, %v474
      %v476 = vsel %vm84, %v467, -inf
      %v477 = vmax.f32 %v471, %v476
      %v478 = vsel %vm84, %v468, -inf
      %v479 = vmax.f32 %v472, %v478
      %v480 = vsel %vm84, %v469, -inf
      %v481 = vmax.f32 %v473, %v480
      %v482 = vmax.f32 %v475, %v477
      %v483 = vmax.f32 %v479, %v481
      %v484 = vmax.f32 %v482, %v483
      %v485 = vrot.slane %v484, 4
      %v486 = vmax.f32 %v484, %v485
      %v487 = vrot.slane %v486, 2
      %v488 = vmax.f32 %v486, %v487
      %v489 = vrot.slane %v488, 1
      %v490 = vmax.f32 %v488, %v489
      %v491 = vmax.f32 %v445, %v490
      %v492 = vld [vmem:[%s44 + $0x80] sm:$0xff]
      %v493 = vld [vmem:[%s44 + $0x88] sm:$0xff]
      %v494 = vld [vmem:[%s44 + $0x90] sm:$0xff]
      %v495 = vld [vmem:[%s44 + $0x98] sm:$0xff]
      %v496 = vld [vmem:[%s44 + $0xa0] sm:$0xff]
      %v497 = vld [vmem:[%s44 + $0xa8] sm:$0xff]
      %v498 = vld [vmem:[%s44 + $0xb0] sm:$0xff]
      %v499 = vld [vmem:[%s44 + $0xb8] sm:$0xff]
      %vm500 = vcmp.eq.s32.totalorder %v492, %v407
      %vm501 = vcmp.eq.s32.totalorder %v493, %v407
      %vm502 = vcmp.eq.s32.totalorder %v494, %v407
      %vm503 = vcmp.eq.s32.totalorder %v495, %v407
      %vm504 = vcmp.eq.s32.totalorder %v496, %v407
      %vm505 = vcmp.eq.s32.totalorder %v497, %v407
      %vm506 = vcmp.eq.s32.totalorder %v498, %v407
      %vm507 = vcmp.eq.s32.totalorder %v499, %v407
      %v508 = vsel %vm500, 1.0, 0.0
      %v509 = vsel %vm501, 1.0, 0.0
      %v510 = vsel %vm502, 1.0, 0.0
      %v511 = vsel %vm503, 1.0, 0.0
      %v512 = vsel %vm504, 1.0, 0.0
      %v513 = vsel %vm505, 1.0, 0.0
      %v514 = vsel %vm506, 1.0, 0.0
      %v515 = vsel %vm507, 1.0, 0.0
      %v516 = vsel %vm84, %v508, -inf
      %v517 = vsel %vm84, %v509, -inf
      %v518 = vsel %vm84, %v510, -inf
      %v519 = vsel %vm84, %v511, -inf
      %v520 = vsel %vm84, %v512, -inf
      %v521 = vmax.f32 %v516, %v520
      %v522 = vsel %vm84, %v513, -inf
      %v523 = vmax.f32 %v517, %v522
      %v524 = vsel %vm84, %v514, -inf
      %v525 = vmax.f32 %v518, %v524
      %v526 = vsel %vm84, %v515, -inf
      %v527 = vmax.f32 %v519, %v526
      %v528 = vmax.f32 %v521, %v523
      %v529 = vmax.f32 %v525, %v527
      %v530 = vmax.f32 %v528, %v529
      %v531 = vrot.slane %v530, 4
      %v532 = vmax.f32 %v530, %v531
      %v533 = vrot.slane %v532, 2
      %v534 = vmax.f32 %v532, %v533
      %v535 = vrot.slane %v534, 1
      %v536 = vmax.f32 %v534, %v535
      %v537 = vmax.f32 %v491, %v536
      %v538 = vld [vmem:[%s44 + $0xc0] sm:$0xff]
      %v539 = vld [vmem:[%s44 + $0xc8] sm:$0xff]
      %v540 = vld [vmem:[%s44 + $0xd0] sm:$0xff]
      %v541 = vld [vmem:[%s44 + $0xd8] sm:$0xff]
      %v542 = vld [vmem:[%s44 + $0xe0] sm:$0xff]
      %v543 = vld [vmem:[%s44 + $0xe8] sm:$0xff]
      %v544 = vld [vmem:[%s44 + $0xf0] sm:$0xff]
      %v545 = vld [vmem:[%s44 + $0xf8] sm:$0xff]
      %vm546 = vcmp.eq.s32.totalorder %v538, %v407
      %vm547 = vcmp.eq.s32.totalorder %v539, %v407
      %vm548 = vcmp.eq.s32.totalorder %v540, %v407
      %vm549 = vcmp.eq.s32.totalorder %v541, %v407
      %vm550 = vcmp.eq.s32.totalorder %v542, %v407
      %vm551 = vcmp.eq.s32.totalorder %v543, %v407
      %vm552 = vcmp.eq.s32.totalorder %v544, %v407
      %vm553 = vcmp.eq.s32.totalorder %v545, %v407
      %v554 = vsel %vm546, 1.0, 0.0
      %v555 = vsel %vm547, 1.0, 0.0
      %v556 = vsel %vm548, 1.0, 0.0
      %v557 = vsel %vm549, 1.0, 0.0
      %v558 = vsel %vm550, 1.0, 0.0
      %v559 = vsel %vm551, 1.0, 0.0
      %v560 = vsel %vm552, 1.0, 0.0
      %v561 = vsel %vm553, 1.0, 0.0
      %v562 = vsel %vm84, %v554, -inf
      %v563 = vsel %vm84, %v555, -inf
      %v564 = vsel %vm84, %v556, -inf
      %v565 = vsel %vm84, %v557, -inf
      %v566 = vsel %vm84, %v558, -inf
      %v567 = vmax.f32 %v562, %v566
      %v568 = vsel %vm84, %v559, -inf
      %v569 = vmax.f32 %v563, %v568
      %v570 = vsel %vm84, %v560, -inf
      %v571 = vmax.f32 %v564, %v570
      %v572 = vsel %vm84, %v561, -inf
      %v573 = vmax.f32 %v565, %v572
      %v574 = vmax.f32 %v567, %v569
      %v575 = vmax.f32 %v571, %v573
      %v576 = vmax.f32 %v574, %v575
      %v577 = vrot.slane %v576, 4
      %v578 = vmax.f32 %v576, %v577
      %v579 = vrot.slane %v578, 2
      %v580 = vmax.f32 %v578, %v579
      %v581 = vrot.slane %v580, 1
      %v582 = vmax.f32 %v580, %v581
      %v583 = vmax.f32 %v537, %v582
      %s584 = scalar_lea.vmem %s38, %s392
      %v585 = vld [vmem:[%s584] sm:$0x1]
      %v586 = vmul.f32 %v583, %v585
      %v587 = vadd.f32 %v397, %v586
      %v588 = vadd.f32 %v398, %v583
    $region18: #{tpu_custom_call.1} parent=1 // loop_footer
      %s396 = sadd.s32 1, %s392
    $region19: #{tpu_custom_call.1} parent=1 // loop_footer_branch
      %391 = sbr.rel target = $region15
    $region20: #{tpu_custom_call.1} parent=1 // loop_exit
      _
    %v589 = vmul.f32 %v398, %v321
    %v590 = vsub.f32 %v397, %v589
    %v591 = vmul.f32 %v590, -0.9
    %v592 = vmul.f32 %v321, 256.0
    %v593 = vsub.f32 %v390, %v592
    %v594 = vmul.f32 %v593, 0.000390625
    %v595 = vsub.f32 %v591, %v594
    %v596 = vld [vmem:[#allocation2] sm:$0x1]
    %v597 = vadd.f32 %v596, %v595
    %vm598 = vcmask 122880
    %599 = vst.msk [vmem:[#allocation2] sm:$0x1] %vm598, %v597
    // Predicated region
    $region21: #{tpu_custom_call.1} parent=1 // pred_check
      %p600 = pneg %p46
    $region22: #{tpu_custom_call.1} parent=1 // pred_check_branch
      %602 = sbr.rel (%p600) target = $region24
    $region23: #{tpu_custom_call.1} parent=1 // pred_region
      %v603 = vld [vmem:[#allocation2] sm:$0x1]
      %v604 = vsel %vm598, %v603, 0.0
      %605 = vadd.xlane.f32.xlu0 %v604
      %v606 = vpop.xlane.xlu0 %605
      %vm607 = vcmask 0
      %608 = vst.msk [vmem:[#allocation3] sm:$0x1] %vm607, %v606
    $region24: #{tpu_custom_call.1} parent=1 // pred_fallthru
      _
    // Predicated region
    $region25: #{tpu_custom_call.1} parent=1 // pred_check
      _
    $region26: #{tpu_custom_call.1} parent=1 // pred_check_branch
      %610 = sbr.rel (0) target = $region28
    $region27: #{tpu_custom_call.1} parent=1 // pred_region
      %s612 = ssub.s32 16, 16
      %613 = vsyncadd [#allocation4], %s612
      %s615 = sshll.u32 [#allocation3], 4
      %s616 = int_to_ptr.vmem [resolvable:$true] %s615
      %618 = dma.vmem_to_hbm [thread:$0]  %s616, 16, %s2, [#allocation4]
    $region28: #{tpu_custom_call.1} parent=1 // pred_fallthru
      _
    // Predicated region
    $region29: #{tpu_custom_call.1} parent=1 // pred_check
      _
    $region30: #{tpu_custom_call.1} parent=1 // pred_check_branch
      %620 = sbr.rel (0) target = $region32
    $region31: #{tpu_custom_call.1} parent=1 // pred_region
      %621 = dma.done [#allocation4], 16
    $region32: #{tpu_custom_call.1} parent=1 // pred_fallthru
      _
    %622 = vsyncpa [#allocation4], 1

</llo_original>
